<compile_context>
chip_gen: v6e
topology: v6e:2x2x1
jax: 0.10.0
libtpu: 0.0.40
codegen_flags: <defaults>
</compile_context>

<pallas_src>
import numpy as np
import jax
import jax.numpy as jnp
from jax.experimental import pallas as pl
from jax.experimental.pallas import tpu as pltpu

FEATURE_DIM = 128   # self.feature_dim in the PyTorch module
HIDDEN = 32         # hidden_channels (encoder output width)

# Stage-2 tile caps (rows multiple of 8, cols multiple of 128 -> lane-dense
# stores).  Per-step working set at the caps is ~9 MiB, comfortably inside the
# explicit 48 MiB scoped-VMEM limit on v5e/v6e (128 MiB chips) and v7x (64 MiB).
TM_MAX = 512
TN_MAX = 1024
# Stage-1 row-tile cap (whole thin matrix in one grid step whenever possible).
ROWS_MAX = 1024

VMEM_LIMIT_BYTES = 48 * 1024 * 1024


def _round_up(x, m):
    return (x + m - 1) // m * m


def _axis_tiling(n, granule, cap):
    """Return (n_pad, tile) with tile dividing n_pad.

    If n <= cap, a single full-extent block is used: no padding at all (the
    (8,128) rule is satisfied because the block equals the full array dim).
    Otherwise pad only to `granule` and pick the largest divisor tile <= cap.
    """
    if n <= cap:
        return n, n
    n_pad = _round_up(n, granule)
    tile = granule
    d = granule
    while d <= cap:
        if n_pad % d == 0:
            tile = d
        d += granule
    return n_pad, tile


# ----------------------------------------------------------------------------
# Stage 1 kernel: fused Linear (y = x @ W.T + b) + sigmoid, tiled over rows.
# ----------------------------------------------------------------------------
def _linear_sigmoid_kernel(x_ref, w_ref, b_ref, o_ref):
    # contraction on the last axis of both operands == x @ W.T (no transpose)
    y = jax.lax.dot_general(
        x_ref[...], w_ref[...],
        dimension_numbers=(((1,), (1,)), ((), ())),
        preferred_element_type=jnp.float32)
    # bias-add + sigmoid on the f32 accumulator (v5e-safe); cast at the store.
    o_ref[...] = jax.nn.sigmoid(y + b_ref[...]).astype(o_ref.dtype)


def linear_sigmoid_pallas(x_bf16, w, b):
    rows, in_dim = x_bf16.shape
    out_dim = w.shape[0]
    rows_pad, tile = _axis_tiling(rows, 8, ROWS_MAX)
    xp = x_bf16 if rows_pad == rows else jnp.pad(
        x_bf16, ((0, rows_pad - rows), (0, 0)))
    y = pl.pallas_call(
        _linear_sigmoid_kernel,
        grid=(rows_pad // tile,),
        in_specs=[
            pl.BlockSpec((tile, in_dim), lambda i: (i, 0)),
            pl.BlockSpec((out_dim, in_dim), lambda i: (0, 0)),
            pl.BlockSpec((1, out_dim), lambda i: (0, 0)),
        ],
        out_specs=pl.BlockSpec((tile, out_dim), lambda i: (i, 0)),
        out_shape=jax.ShapeDtypeStruct((rows_pad, out_dim), jnp.bfloat16),
        compiler_params=pltpu.CompilerParams(
            dimension_semantics=("parallel",),
            vmem_limit_bytes=VMEM_LIMIT_BYTES),
    )(xp, w.astype(jnp.bfloat16), b.reshape(1, -1).astype(jnp.float32))
    return y if rows_pad == rows else y[:rows]


# ----------------------------------------------------------------------------
# Stage 2 kernel: output-tiled bipartite adjacency with one K=160 contraction
#   adj[i, j] = sigmoid( cellcat_i . drugcat_j )
# where cellcat = cat(cellpos, cellfea) and drugcat = cat(drugpos, drugfea).
# ----------------------------------------------------------------------------
def _adj_kernel(cellcat_ref, drugcat_ref, adj_ref):
    logits = jax.lax.dot_general(
        cellcat_ref[...], drugcat_ref[...],
        dimension_numbers=(((1,), (1,)), ((), ())),   # A @ B.T, no transpose
        preferred_element_type=jnp.float32)
    # sigmoid on the f32 accumulator; reciprocal on the EUP slot; bf16 store
    # halves the dominant HBM writeback stream.
    sig = pl.reciprocal(1.0 + jnp.exp(-logits), approx=True)
    adj_ref[...] = sig.astype(adj_ref.dtype)


def pos_adj_pallas(cellcat_bf16, drugcat_bf16):
    """sigmoid(cellcat @ drugcat.T), bf16 output, exact (n_cell, n_drug)."""
    n_cell, k = cellcat_bf16.shape
    n_drug = drugcat_bf16.shape[0]

    m_pad, tm = _axis_tiling(n_cell, 8, TM_MAX)
    n_pad, tn = _axis_tiling(n_drug, 128, TN_MAX)

    cc = cellcat_bf16 if m_pad == n_cell else jnp.pad(
        cellcat_bf16, ((0, m_pad - n_cell), (0, 0)))
    dc = drugcat_bf16 if n_pad == n_drug else jnp.pad(
        drugcat_bf16, ((0, n_pad - n_drug), (0, 0)))

    adj = pl.pallas_call(
        _adj_kernel,
        grid=(m_pad // tm, n_pad // tn),
        in_specs=[
            pl.BlockSpec((tm, k), lambda i, j: (i, 0)),
            pl.BlockSpec((tn, k), lambda i, j: (j, 0)),
        ],
        out_specs=pl.BlockSpec((tm, tn), lambda i, j: (i, j)),
        out_shape=jax.ShapeDtypeStruct((m_pad, n_pad), jnp.bfloat16),
        compiler_params=pltpu.CompilerParams(
            dimension_semantics=("parallel", "parallel"),
            vmem_limit_bytes=VMEM_LIMIT_BYTES),
    )(cc, dc)

    # Slice only when (8,128)-granularity padding actually existed; for
    # unpadded extents the kernel already wrote the exact shape (no copy).
    if m_pad != n_cell or n_pad != n_drug:
        adj = adj[:n_cell, :n_drug]
    return adj


# ----------------------------------------------------------------------------
# Deterministic stand-ins for the injected sub-modules (plain-JAX glue).
# ----------------------------------------------------------------------------
# TODO(synk): self.feat is an injected feature extractor (drug GCN + omics MLP);
# modeled as deterministic tanh projections to FEATURE_DIM.
def feat_standin(params, epoch, epochs, drug_feature, drug_adj, ibatch,
                 mutation_data, gexpr_data, methylation_data):
    cell_in = jnp.concatenate([mutation_data, gexpr_data, methylation_data], axis=1)
    cell_feat = jnp.tanh(cell_in @ params["W_cellproj"])
    drug_feat = jnp.tanh(drug_feature @ params["W_drugproj"])
    return jnp.concatenate([cell_feat, drug_feat], axis=0)  # (N, 128), cells first


# TODO(synk): self.encoder is an injected graph encoder; modeled as one round of
# symmetric neighbor aggregation over the given edge_index + a linear + tanh
# (data-dependent scatter-add stays in XLA, not Pallas).
def encoder_standin(params, feature, edge_index):
    src, dst = edge_index[0], edge_index[1]
    agg = jnp.zeros_like(feature)
    agg = agg.at[dst].add(feature[src])
    agg = agg.at[src].add(feature[dst])
    return jnp.tanh((feature + agg) @ params["W_enc"])  # (N, HIDDEN)


# TODO(synk): self.summary is an injected readout; modeled DGI-style.
def summary_standin(feature, z):
    return jax.nn.sigmoid(jnp.mean(z, axis=0))


# ----------------------------------------------------------------------------
# Forward pass mirroring GenerateFeature.forward
# ----------------------------------------------------------------------------
def generate_feature_forward(params, index, epoch, epochs, drug_feature, drug_adj,
                             ibatch, mutation_data, gexpr_data, methylation_data,
                             edge):
    # edge is a host numpy array, exactly as in the PyTorch forward.
    pos_edge = jnp.asarray(edge[edge[:, 2] == 1, 0:2].T, dtype=jnp.int32)
    neg_edge = jnp.asarray(edge[edge[:, 2] == -1, 0:2].T, dtype=jnp.int32)

    feature = feat_standin(params, epoch, epochs, drug_feature, drug_adj, ibatch,
                           mutation_data, gexpr_data, methylation_data)
    pos_z = encoder_standin(params, feature, pos_edge)
    neg_z = encoder_standin(params, feature, neg_edge)
    summary_pos = summary_standin(feature, pos_z)
    summary_neg = summary_standin(feature, neg_z)

    # Stage 1: fc/fd linears + sigmoid (Pallas), hoisted out of the adjacency.
    cellfea = linear_sigmoid_pallas(feature[:index].astype(jnp.bfloat16),
                                    params["fc_w"], params["fc_b"])
    drugfea = linear_sigmoid_pallas(feature[index:].astype(jnp.bfloat16),
                                    params["fd_w"], params["fd_b"])

    # Wrapper-side concat to (rows, 160) bf16 so stage 2 is ONE K=160 MXU pass
    # per output tile (the concat is O(rows*160) bf16 — negligible traffic).
    cellcat = jnp.concatenate([pos_z[:index].astype(jnp.bfloat16), cellfea], axis=1)
    drugcat = jnp.concatenate([pos_z[index:].astype(jnp.bfloat16), drugfea], axis=1)

    # Stage 2: 2-D output-tiled adjacency (bf16 output, exact shape).
    pos_adj = pos_adj_pallas(cellcat, drugcat)
    # NOTE: pos_adj is bf16 (~3 decimal digits); downstream consumers must
    # tolerate bf16 (well within this module's sigmoid-output precision needs).
    return pos_z, neg_z, summary_pos, summary_neg, pos_adj.reshape(-1)


# ----------------------------------------------------------------------------
# Deterministic parameter init (glorot-style, PRNGKey(0))
# ----------------------------------------------------------------------------
def xavier(key, shape):
    if len(shape) > 1:
        fan_out, fan_in = shape[-2], shape[-1]
    else:
        fan_out = fan_in = shape[-1]
    a = float(np.sqrt(6.0 / (fan_in + fan_out)))
    return jax.random.uniform(key, shape, jnp.float32, -a, a)


if __name__ == "__main__":
    key = jax.random.PRNGKey(0)
    ks = jax.random.split(key, 10)

    # Small synthetic problem: 8 cell lines, 8 drugs, 16 graph nodes total.
    index = 8          # number of cells (self.index)
    n_drug = 8
    n_mut, n_gexpr, n_meth, n_drugdim = 34, 48, 16, 75

    params = {
        "W_cellproj": xavier(ks[0], (n_mut + n_gexpr + n_meth, FEATURE_DIM)),
        "W_drugproj": xavier(ks[1], (n_drugdim, FEATURE_DIM)),
        "W_enc":      xavier(ks[2], (FEATURE_DIM, HIDDEN)),
        # torch.nn.Linear(128, 128): weight (out, in), zero bias
        "fc_w": xavier(ks[3], (128, FEATURE_DIM)),
        "fc_b": jnp.zeros((128,), jnp.float32),
        "fd_w": xavier(ks[4], (128, FEATURE_DIM)),
        "fd_b": jnp.zeros((128,), jnp.float32),
    }
    # self.weight (hidden, hidden) exists in the module but is only used by
    # discriminate()/loss(), not by forward(); initialized for completeness.
    params["weight"] = xavier(ks[5], (HIDDEN, HIDDEN))

    mutation_data = jax.random.normal(ks[6], (index, n_mut), jnp.float32)
    gexpr_data = jax.random.normal(ks[7], (index, n_gexpr), jnp.float32)
    methylation_data = jax.random.normal(ks[8], (index, n_meth), jnp.float32)
    drug_feature = jax.random.normal(ks[9], (n_drug, n_drugdim), jnp.float32)
    drug_adj = jnp.eye(n_drug, dtype=jnp.float32)          # unused by stand-in
    ibatch = jnp.arange(n_drug, dtype=jnp.int32)           # unused by stand-in

    # edge: (E, 3) numpy array of [cell_node, drug_node, label(+1/-1)]
    edges = []
    for c in range(index):
        for d in range(n_drug):
            label = 1 if (c + d) % 2 == 0 else -1
            edges.append([c, index + d, label])
    edge = np.asarray(edges, dtype=np.int64)

    outs = generate_feature_forward(params, index, 0, 100, drug_feature, drug_adj,
                                    ibatch, mutation_data, gexpr_data,
                                    methylation_data, edge)
    pos_z, neg_z, summary_pos, summary_neg, pos_adj_flat = [
        jax.block_until_ready(o) for o in outs]

    # Cross-check the Pallas hot path against a plain-JAX f32 reference
    # (bf16 operands + bf16 adjacency -> loose but tight-enough tolerance on
    # sigmoid outputs).
    feature = feat_standin(params, 0, 100, drug_feature, drug_adj, ibatch,
                           mutation_data, gexpr_data, methylation_data)
    pos_edge = jnp.asarray(edge[edge[:, 2] == 1, 0:2].T, dtype=jnp.int32)
    pz = encoder_standin(params, feature, pos_edge)
    cellfea_ref = jax.nn.sigmoid(feature[:index] @ params["fc_w"].T + params["fc_b"])
    drugfea_ref = jax.nn.sigmoid(feature[index:] @ params["fd_w"].T + params["fd_b"])
    cellpos_ref = jnp.concatenate([pz[:index], cellfea_ref], axis=1)
    drugpos_ref = jnp.concatenate([pz[index:], drugfea_ref], axis=1)
    adj_ref = jax.nn.sigmoid(cellpos_ref @ drugpos_ref.T).reshape(-1)

    assert pos_z.shape == (index + n_drug, HIDDEN)
    assert neg_z.shape == (index + n_drug, HIDDEN)
    assert summary_pos.shape == (HIDDEN,)
    assert summary_neg.shape == (HIDDEN,)
    assert pos_adj_flat.shape == (index * n_drug,)
    np.testing.assert_allclose(
        np.asarray(pos_adj_flat.astype(jnp.float32)),
        np.asarray(adj_ref), rtol=0.0, atol=3e-2)
    print("KERNEL_OK")
</pallas_src>

<mosaic_0001>
module attributes {stable_mosaic.version = 11 : i64} {
  func.func @_linear_sigmoid_kernel(%arg0: i32, %arg1: memref<8x128xbf16, #tpu.memory_space<vmem>>, %arg2: memref<128x128xbf16, #tpu.memory_space<vmem>>, %arg3: memref<1x128xf32, #tpu.memory_space<vmem>>, %arg4: memref<8x128xbf16, #tpu.memory_space<vmem>>) attributes {dimension_semantics = [#tpu.dimension_semantics<parallel>], iteration_bounds = array<i64: 1>, scalar_prefetch = 0 : i64, scratch_operands = 0 : i64, tpu.core_type = #tpu.core_type<tc>, window_params = [{transform_indices = @transform_0, window_bounds = array<i64: 8, 128>}, {pipeline_mode = #tpu.pipeline_mode<synchronous>, transform_indices = @transform_1, window_bounds = array<i64: 128, 128>}, {pipeline_mode = #tpu.pipeline_mode<synchronous>, transform_indices = @transform_2, window_bounds = array<i64: 1, 128>}, {transform_indices = @transform_3, window_bounds = array<i64: 8, 128>}]} {
    %c0 = arith.constant 0 : index
    %c0_0 = arith.constant 0 : index
    %0 = vector.load %arg1[%c0, %c0_0] : memref<8x128xbf16, #tpu.memory_space<vmem>>, vector<8x128xbf16>
    %c0_1 = arith.constant 0 : index
    %c0_2 = arith.constant 0 : index
    %1 = vector.load %arg2[%c0_1, %c0_2] : memref<128x128xbf16, #tpu.memory_space<vmem>>, vector<128x128xbf16>
    %cst = arith.constant dense<0.000000e+00> : vector<8x128xf32>
    %2 = tpu.matmul %0, %1, %cst {dimension_numbers = #tpu.dot_dimension_numbers<[1], [1], [0], [0], [0, 0, 1, 0], [], []>} : vector<8x128xbf16>, vector<128x128xbf16>, vector<8x128xf32> -> vector<8x128xf32>
    %c0_3 = arith.constant 0 : index
    %c0_4 = arith.constant 0 : index
    %3 = vector.load %arg3[%c0_3, %c0_4] : memref<1x128xf32, #tpu.memory_space<vmem>>, vector<1x128xf32>
    %4 = vector.broadcast %3 : vector<1x128xf32> to vector<8x128xf32>
    %5 = arith.addf %2, %4 : vector<8x128xf32>
    %6 = arith.negf %5 : vector<8x128xf32>
    %7 = math.exp %6 : vector<8x128xf32>
    %cst_5 = arith.constant 1.000000e+00 : f32
    %8 = vector.broadcast %cst_5 : f32 to vector<8x128xf32>
    %9 = arith.addf %8, %7 : vector<8x128xf32>
    %10 = arith.divf %8, %9 : vector<8x128xf32>
    %11 = arith.truncf %10 : vector<8x128xf32> to vector<8x128xbf16>
    %c0_6 = arith.constant 0 : index
    %c0_7 = arith.constant 0 : index
    %12 = vector.load %arg4[%c0_6, %c0_7] : memref<8x128xbf16, #tpu.memory_space<vmem>>, vector<8x128xbf16>
    tpu.vector_store %arg4[%c0_6, %c0_7], %11 {strides = array<i32>} : memref<8x128xbf16, #tpu.memory_space<vmem>>, vector<8x128xbf16>,
    return
  }
  func.func @transform_0(%arg0: i32) -> (i32, i32) {
    %c0_i32 = arith.constant 0 : i32
    %c0_i32_0 = arith.constant 0 : i32
    return %arg0, %c0_i32 : i32, i32
  }
  func.func @transform_1(%arg0: i32) -> (i32, i32) {
    %c0_i32 = arith.constant 0 : i32
    %c0_i32_0 = arith.constant 0 : i32
    %c0_i32_1 = arith.constant 0 : i32
    return %c0_i32, %c0_i32_0 : i32, i32
  }
  func.func @transform_2(%arg0: i32) -> (i32, i32) {
    %c0_i32 = arith.constant 0 : i32
    %c0_i32_0 = arith.constant 0 : i32
    %c0_i32_1 = arith.constant 0 : i32
    return %c0_i32, %c0_i32_0 : i32, i32
  }
  func.func @transform_3(%arg0: i32) -> (i32, i32) {
    %c0_i32 = arith.constant 0 : i32
    %c0_i32_0 = arith.constant 0 : i32
    return %arg0, %c0_i32 : i32, i32
  }
}

</mosaic_0001>

<llo_original>
// kernel: tpu_custom_call.1
$region0: #{tpu_custom_call.1}
  #allocation0 [shape = 'u32[]', space=smem, size = 0x4, offset = 0x4, fixed_abs, tag = 'smem constant byte address 0x4 - core index']
  #allocation1 [shape = 'u32[144,128]{1,0:T(1,128)}', space=vmem, size = 0x12000, scoped, tag = 'internal scratch']
  %s0 = inlined_call_operand.hbm [shape: bf16[8,128], index: 0, kind: input, shape index: {}]
  %s1 = inlined_call_operand.hbm [shape: bf16[128,128], index: 1, kind: input, shape index: {}]
  %s2 = inlined_call_operand.vmem [shape: f32[1,128], index: 2, kind: input, shape index: {}]
  %s3 = inlined_call_operand.hbm [shape: bf16[8,128], index: 3, kind: output, shape index: {}]
  %s4 = sld [smem:[#allocation0]]
  $region30: #{tpu_custom_call.1} parent=0
    _
  %s6 = ssub.s32 1, %s4
  %s7 = scalar_select 0, %s6, %s4
  $region1: #{tpu_custom_call.1} parent=0
    #allocation2 [shape = 'u8[2048]{0}', space=vmem, size = 0x800, scoped, tag = 'input window, operand 0, single buffered']
    #allocation3 [shape = 's32[1]{0}', space=sflag, size = 0x4, scoped, tag = 'scoped memory for tpu_custom_call.1']
    #allocation4 [shape = 's32[1]{0}', space=sflag, size = 0x4, scoped, tag = 'scoped memory for tpu_custom_call.1']
    #allocation5 [shape = 'u8[32768]{0}', space=vmem, size = 0x8000, scoped, tag = 'input window, operand 1, single buffered']
    #allocation6 [shape = 's32[1]{0}', space=sflag, size = 0x4, scoped, tag = 'scoped memory for tpu_custom_call.1']
    #allocation7 [shape = 'u8[2048]{0}', space=vmem, size = 0x800, scoped, tag = 'output window, operand 0, single buffered']
    %8 = vsyncpa [#allocation3], 0
    %9 = vsyncpa [#allocation6], 0
    %10 = vsyncpa [#allocation4], 0
    // Predicated region
    $region2: #{tpu_custom_call.1} parent=1 // pred_check
      _
    $region3: #{tpu_custom_call.1} parent=1 // pred_check_branch
      %12 = sbr.rel (0) target = $region5
    $region4: #{tpu_custom_call.1} parent=1 // pred_region
      %s14 = ssub.s32 64, 64
      %15 = vsyncadd [#allocation3], %s14
      %s17 = sshll.u32 [#allocation2], 4
      %s18 = int_to_ptr.vmem [resolvable:$true] %s17
      %20 = dma.hbm_to_vmem [thread:$0]  %s0, 64, %s18, [#allocation3]
    $region5: #{tpu_custom_call.1} parent=1 // pred_fallthru
      _
    // Predicated region
    $region6: #{tpu_custom_call.1} parent=1 // pred_check
      _
    $region7: #{tpu_custom_call.1} parent=1 // pred_check_branch
      %22 = sbr.rel (0) target = $region9
    $region8: #{tpu_custom_call.1} parent=1 // pred_region
      %s24 = ssub.s32 1024, 1024
      %25 = vsyncadd [#allocation6], %s24
      %s26 = sshll.u32 [#allocation5], 4
      %s27 = int_to_ptr.vmem [resolvable:$true] %s26
      %32 = dma.hbm_to_vmem [thread:$0]  %s1, 1024, %s27, [#allocation6], 64, 64, 4
    $region9: #{tpu_custom_call.1} parent=1 // pred_fallthru
      _
    // Predicated region
    $region10: #{tpu_custom_call.1} parent=1 // pred_check
      _
    $region11: #{tpu_custom_call.1} parent=1 // pred_check_branch
      %34 = sbr.rel (0) target = $region13
    $region12: #{tpu_custom_call.1} parent=1 // pred_region
      _
    $region13: #{tpu_custom_call.1} parent=1 // pred_fallthru
      _
    // Predicated region
    $region14: #{tpu_custom_call.1} parent=1 // pred_check
      _
    $region15: #{tpu_custom_call.1} parent=1 // pred_check_branch
      %36 = sbr.rel (0) target = $region17
    $region16: #{tpu_custom_call.1} parent=1 // pred_region
      %37 = dma.done [#allocation3], 64
    $region17: #{tpu_custom_call.1} parent=1 // pred_fallthru
      _
    // Predicated region
    $region18: #{tpu_custom_call.1} parent=1 // pred_check
      _
    $region19: #{tpu_custom_call.1} parent=1 // pred_check_branch
      %39 = sbr.rel (0) target = $region21
    $region20: #{tpu_custom_call.1} parent=1 // pred_region
      %40 = dma.done [#allocation6], 1024
    $region21: #{tpu_custom_call.1} parent=1 // pred_fallthru
      _
    %v42 = vld [vmem:[#allocation2] sm:$0xf]
    %v43 = vld [vmem:[#allocation5] sm:$0xf]
    %v44 = vld [vmem:[#allocation5 + $0x4] sm:$0xf]
    %v45 = vld [vmem:[#allocation5 + $0x8] sm:$0xf]
    %v46 = vld [vmem:[#allocation5 + $0xc] sm:$0xf]
    %v47 = vld [vmem:[#allocation5 + $0x10] sm:$0xf]
    %v48 = vld [vmem:[#allocation5 + $0x14] sm:$0xf]
    %v49 = vld [vmem:[#allocation5 + $0x18] sm:$0xf]
    %v50 = vld [vmem:[#allocation5 + $0x1c] sm:$0xf]
    %v51 = vld [vmem:[#allocation5 + $0x20] sm:$0xf]
    %v52 = vld [vmem:[#allocation5 + $0x24] sm:$0xf]
    %v53 = vld [vmem:[#allocation5 + $0x28] sm:$0xf]
    %v54 = vld [vmem:[#allocation5 + $0x2c] sm:$0xf]
    %v55 = vld [vmem:[#allocation5 + $0x30] sm:$0xf]
    %v56 = vld [vmem:[#allocation5 + $0x34] sm:$0xf]
    %v57 = vld [vmem:[#allocation5 + $0x38] sm:$0xf]
    %v58 = vld [vmem:[#allocation5 + $0x3c] sm:$0xf]
    %v59 = vld [vmem:[%s2] sm:$0x1]
    %v61 = vlaneseq
    %v62 = vshrl.u32 %v61, 7
    %v63 = vsub.s32 0, %v62
    %v64 = vrot.slane %v59, %v63
    %v82 = vunpack.c.l.b16 %v43
    %v83 = vunpack.c.l.b16 %v44
    %v84 = vunpack.c.l.b16 %v45
    %v85 = vunpack.c.l.b16 %v46
    %v86 = vunpack.c.l.b16 %v47
    %v87 = vunpack.c.l.b16 %v48
    %v88 = vunpack.c.l.b16 %v49
    %v89 = vunpack.c.l.b16 %v50
    %v90 = vunpack.c.l.b16 %v51
    %v91 = vunpack.c.l.b16 %v52
    %v92 = vunpack.c.l.b16 %v53
    %v93 = vunpack.c.l.b16 %v54
    %v94 = vunpack.c.l.b16 %v55
    %v95 = vunpack.c.l.b16 %v56
    %v96 = vunpack.c.l.b16 %v57
    %v97 = vunpack.c.l.b16 %v58
    %v98 = vpack.c.b16 %v83, %v82
    %v99 = vpack.c.b16 %v85, %v84
    %v100 = vpack.c.b16 %v87, %v86
    %v101 = vpack.c.b16 %v89, %v88
    %v102 = vpack.c.b16 %v91, %v90
    %v103 = vpack.c.b16 %v93, %v92
    %v104 = vpack.c.b16 %v95, %v94
    %v105 = vpack.c.b16 %v97, %v96
    %114 = vmatprep.subr.bf16.mxu0 0
    %115 = vmatpush1.bf16.xpose.msra.mxu0 %v105
    %116 = vmatprep.subr.bf16.mxu0 0
    %117 = vmatpush1.bf16.xpose.msra.mxu0 %v104
    %118 = vmatprep.subr.bf16.mxu0 0
    %119 = vmatpush1.bf16.xpose.msra.mxu0 %v103
    %120 = vmatprep.subr.bf16.mxu0 0
    %121 = vmatpush1.bf16.xpose.msra.mxu0 %v102
    %122 = vmatprep.subr.bf16.mxu0 0
    %123 = vmatpush1.bf16.xpose.msra.mxu0 %v101
    %124 = vmatprep.subr.bf16.mxu0 0
    %125 = vmatpush1.bf16.xpose.msra.mxu0 %v100
    %126 = vmatprep.subr.bf16.mxu0 0
    %127 = vmatpush1.bf16.xpose.msra.mxu0 %v99
    %128 = vmatprep.subr.bf16.mxu0 0
    %129 = vmatpush1.bf16.xpose.msra.mxu0 %v98
    %130 = vmatprep.subr.bf16.mxu0 0
    %131 = vmatpush2.bf16.xpose.msra.mxu0 0
    %132 = vmatprep.subr.bf16.mxu0 0
    %133 = vmatpush2.bf16.xpose.msra.mxu0 0
    %134 = vmatprep.subr.bf16.mxu0 0
    %135 = vmatpush2.bf16.xpose.msra.mxu0 0
    %136 = vmatprep.subr.bf16.mxu0 0
    %137 = vmatpush2.bf16.xpose.msra.mxu0 0
    %138 = vmatprep.subr.bf16.mxu0 0
    %139 = vmatpush2.bf16.xpose.msra.mxu0 0
    %140 = vmatprep.subr.bf16.mxu0 0
    %141 = vmatpush2.bf16.xpose.msra.mxu0 0
    %142 = vmatprep.subr.bf16.mxu0 0
    %143 = vmatpush2.bf16.xpose.msra.mxu0 0
    %144 = vmatprep.subr.bf16.mxu0 0
    %145 = vmatpush2.bf16.xpose.msra.mxu0 0
    %146 = vmatprep.mubr.bf16.mxu0 0
    %147 = vmatmul.mubr.bf16.gmra.mxu0 %v42
    %v148 = vpop.f32.mrf.mxu0
    %v149 = vadd.f32 %v64, %v148
    %v150 = vpop.f32.mrf.mxu0
    %v151 = vpop.f32.mrf.mxu0
    %v152 = vpop.f32.mrf.mxu0
    %153 = vdwg.mxu0
    %v154 = vxor.u32 %v149, 2147483648
    %v155 = vmul.f32 %v154, 1.442695
    %v156 = vpow.pop %v155
    %v157 = vadd.f32 %v156, 1.0
    %v158 = vrcp.pop %v157
    %v159 = vmul.f32 1.0, %v158
    %v160 = vpack.c.bf16 %v159, %v159
    %161 = vst [vmem:[#allocation7] sm:$0xf] %v160
    // Predicated region
    $region22: #{tpu_custom_call.1} parent=1 // pred_check
      _
    $region23: #{tpu_custom_call.1} parent=1 // pred_check_branch
      %163 = sbr.rel (0) target = $region25
    $region24: #{tpu_custom_call.1} parent=1 // pred_region
      %s165 = ssub.s32 64, 64
      %166 = vsyncadd [#allocation4], %s165
      %s168 = sshll.u32 [#allocation7], 4
      %s169 = int_to_ptr.vmem [resolvable:$true] %s168
      %171 = dma.vmem_to_hbm [thread:$0]  %s169, 64, %s3, [#allocation4]
    $region25: #{tpu_custom_call.1} parent=1 // pred_fallthru
      _
    // Predicated region
    $region26: #{tpu_custom_call.1} parent=1 // pred_check
      _
    $region27: #{tpu_custom_call.1} parent=1 // pred_check_branch
      %173 = sbr.rel (0) target = $region29
    $region28: #{tpu_custom_call.1} parent=1 // pred_region
      %174 = dma.done [#allocation4], 64
    $region29: #{tpu_custom_call.1} parent=1 // pred_fallthru
      _
    %175 = vsyncpa [#allocation3], 1
    %176 = vsyncpa [#allocation6], 1
    %177 = vsyncpa [#allocation4], 1

</llo_original>
